<compile_context>
chip_gen: v7x
topology: tpu7x:2x2x1
jax: 0.10.0
libtpu: 0.0.40
codegen_flags: <defaults>
</compile_context>

<pallas_src>
import jax
import jax.numpy as jnp
from jax import lax
from jax.experimental import pallas as pl
from jax.experimental.pallas import tpu as pltpu


def _mixcfn_kernel(xr_ref, w1_ref, b1_ref, m_ref, bf_ref, o_ref, acc_ref):
    # xr_ref : (B, H, W*Cin)      input rows, channels minor on the lane axis
    # w1_ref : (3, W*Cin, W*Cout) conv1 banded weights, one band per vertical tap
    # b1_ref : (1, W*Cout)        conv1 bias, tiled along the lane axis
    # m_ref  : (3, W*Cout, W*Cout) fused depthwise3x3+1x1 banded weights per tap
    # bf_ref : (1, W*Cout)        fused bias (w2^T @ dw_b + b2), lane-tiled
    # o_ref  : (B, H, W*Cout)     lane-dense output block (also used as acc)
    # acc_ref: (B, H, W*Cout)     VMEM scratch accumulator for conv1
    B, H, WC = o_ref.shape
    KI = xr_ref.shape[2]
    BH = B * H

    # ---- conv1 (3x3, padding=1): 3 lane-dense banded matmuls ----------------
    # Each dot handles all horizontal taps and input channels at once
    # (K = W*Cin, N = W*Cout = 128); vertical taps land on shifted output rows.
    xr2 = xr_ref[...].reshape(BH, KI)
    d_mid = jnp.dot(xr2, w1_ref[1], preferred_element_type=jnp.float32).reshape(B, H, WC)
    d_up = jnp.dot(xr2, w1_ref[0], preferred_element_type=jnp.float32).reshape(B, H, WC)
    d_dn = jnp.dot(xr2, w1_ref[2], preferred_element_type=jnp.float32).reshape(B, H, WC)
    # bias fused into the accumulator init (no separate zero + add passes)
    acc_ref[...] = b1_ref[...].reshape(1, 1, WC) + d_mid
    # tap ky=0 reads input row h-1  -> contribution computed at row h-1
    acc_ref[:, 1:, :] += d_up[:, :H - 1, :]
    # tap ky=2 reads input row h+1  -> contribution computed at row h+1
    acc_ref[:, :H - 1, :] += d_dn[:, 1:, :]

    # ---- depthwise 3x3 (padding=1) + 1x1 conv, fused -------------------------
    # Both are linear, so per vertical tap ky the horizontal depthwise taps and
    # the channel mix collapse into one banded (W*Cout, W*Cout) matrix.
    a1 = acc_ref[...].reshape(BH, WC)
    e_mid = jnp.dot(a1, m_ref[1], preferred_element_type=jnp.float32).reshape(B, H, WC)
    e_up = jnp.dot(a1, m_ref[0], preferred_element_type=jnp.float32).reshape(B, H, WC)
    e_dn = jnp.dot(a1, m_ref[2], preferred_element_type=jnp.float32).reshape(B, H, WC)
    o_ref[...] = bf_ref[...].reshape(1, 1, WC) + e_mid
    o_ref[:, 1:, :] += e_up[:, :H - 1, :]
    o_ref[:, :H - 1, :] += e_dn[:, 1:, :]

    # ---- ReLU, lane-dense store ----------------------------------------------
    o_ref[...] = jnp.maximum(o_ref[...], 0.0).astype(o_ref.dtype)


def mixcfn_forward(x_nchw, params):
    """x_nchw: (N, Cin, H, W) float32. Returns (N, Cout, H, W), matching PyTorch."""
    conv1_w = params["conv1_w"].astype(jnp.float32)
    conv1_b = params["conv1_b"].astype(jnp.float32)
    dw_w = params["dw_w"].astype(jnp.float32)
    dw_b = params["dw_b"].astype(jnp.float32)
    conv2_w = params["conv2_w"].astype(jnp.float32)
    conv2_b = params["conv2_b"].astype(jnp.float32)

    N, Cin, H, W = x_nchw.shape
    Cout = conv1_w.shape[0]
    WC = W * Cout          # lane width of activations / output (128 for demo)
    KI = W * Cin           # lane width of the input rows

    # glue: NCHW -> (N, H, W*Cin); no padded copy of x is materialized.
    xr = jnp.transpose(x_nchw, (0, 2, 3, 1)).reshape(N, H, KI)

    # ---- conv1 as 3 banded matrices (one per vertical tap ky) ----------------
    # w1b[ky][w_in*Cin + ci, w*Cout + co] = conv1_w[co, ci, ky, w_in - w + 1]
    # (zero outside |w_in - w| <= 1), so horizontal zero-padding is implicit.
    w1_hwio = jnp.transpose(conv1_w, (2, 3, 1, 0))        # (3, 3, Cin, Cout)
    w1b_list = []
    for ky in range(3):
        t = jnp.zeros((W, Cin, W, Cout), jnp.float32)
        for kx in range(3):
            band = jnp.eye(W, W, k=1 - kx, dtype=jnp.float32)  # 1 iff w_in == w + kx - 1
            t = t + jnp.einsum('ab,ic->aibc', band, w1_hwio[ky, kx])
        w1b_list.append(t.reshape(KI, WC))
    w1b = jnp.stack(w1b_list, axis=0)                      # (3, W*Cin, W*Cout)
    b1 = jnp.tile(conv1_b.reshape(1, Cout), (1, W))        # (1, W*Cout)

    # ---- depthwise 3x3 + 1x1 fused into 3 banded matrices --------------------
    # m[ky][w_in*Cout + ci, w*Cout + co] = dw_w[ci,0,ky,w_in-w+1] * conv2_w[co,ci]
    wd = jnp.transpose(dw_w[:, 0, :, :], (1, 2, 0))        # (3, 3, Cout) [ky,kx,c]
    w2 = jnp.transpose(conv2_w[:, :, 0, 0])                # (Cout_in, Cout_out)
    mb_list = []
    for ky in range(3):
        t = jnp.zeros((W, Cout, W, Cout), jnp.float32)
        for kx in range(3):
            band = jnp.eye(W, W, k=1 - kx, dtype=jnp.float32)
            t = t + jnp.einsum('ab,c,cd->acbd', band, wd[ky, kx], w2)
        mb_list.append(t.reshape(WC, WC))
    mb = jnp.stack(mb_list, axis=0)                        # (3, W*Cout, W*Cout)
    # dw bias folded through the 1x1 conv: b_fused = w2^T @ dw_b + b2
    bf = jnp.tile((jnp.dot(dw_b, w2) + conv2_b).reshape(1, Cout), (1, W))

    # ---- batch folding: several images per grid step (bigger matmul M) -------
    bt = 1
    for d in range(1, min(N, 8) + 1):
        if N % d == 0:
            bt = d

    out = pl.pallas_call(
        _mixcfn_kernel,
        out_shape=jax.ShapeDtypeStruct((N, H, WC), jnp.float32),
        grid_spec=pltpu.PrefetchScalarGridSpec(
            num_scalar_prefetch=0,
            grid=(N // bt,),
            in_specs=[
                pl.BlockSpec((bt, H, KI), lambda n: (n, 0, 0)),
                pl.BlockSpec((3, KI, WC), lambda n: (0, 0, 0)),
                pl.BlockSpec((1, WC), lambda n: (0, 0)),
                pl.BlockSpec((3, WC, WC), lambda n: (0, 0, 0)),
                pl.BlockSpec((1, WC), lambda n: (0, 0)),
            ],
            out_specs=pl.BlockSpec((bt, H, WC), lambda n: (n, 0, 0)),
            scratch_shapes=[pltpu.VMEM((bt, H, WC), jnp.float32)],
        ),
        # batch axis is independent -> parallel (lets v7x split it across TCs)
        compiler_params=pltpu.CompilerParams(
            dimension_semantics=("parallel",)),
    )(xr, w1b, b1, mb, bf)

    # lane-dense (N, H, W*Cout) -> NCHW for the module contract
    return jnp.transpose(out.reshape(N, H, W, Cout), (0, 3, 1, 2))


def ref_forward(x, p, cout):
    dn = ("NCHW", "OIHW", "NCHW")
    y = lax.conv_general_dilated(x, p["conv1_w"], (1, 1), "SAME",
                                 dimension_numbers=dn)
    y = y + p["conv1_b"][None, :, None, None]
    y = lax.conv_general_dilated(y, p["dw_w"], (1, 1), "SAME",
                                 dimension_numbers=dn,
                                 feature_group_count=cout)
    y = y + p["dw_b"][None, :, None, None]
    y = lax.conv_general_dilated(y, p["conv2_w"], (1, 1), "SAME",
                                 dimension_numbers=dn)
    y = y + p["conv2_b"][None, :, None, None]
    return jnp.maximum(y, 0.0)


if __name__ == "__main__":
    N, Cin, Cout, H, W = 2, 4, 8, 16, 16

    key = jax.random.PRNGKey(0)
    keys = jax.random.split(key, 7)
    params = {
        "conv1_w": 0.1 * jax.random.normal(keys[0], (Cout, Cin, 3, 3), jnp.float32),
        "conv1_b": 0.1 * jax.random.normal(keys[1], (Cout,), jnp.float32),
        "dw_w":    0.1 * jax.random.normal(keys[2], (Cout, 1, 3, 3), jnp.float32),
        "dw_b":    0.1 * jax.random.normal(keys[3], (Cout,), jnp.float32),
        "conv2_w": 0.1 * jax.random.normal(keys[4], (Cout, Cout, 1, 1), jnp.float32),
        "conv2_b": 0.1 * jax.random.normal(keys[5], (Cout,), jnp.float32),
    }
    x = jax.random.normal(keys[6], (N, Cin, H, W), jnp.float32)

    out = jax.block_until_ready(mixcfn_forward(x, params))
    ref = jax.block_until_ready(ref_forward(x, params, Cout))

    assert out.shape == (N, Cout, H, W)
    assert jnp.allclose(out, ref, atol=1e-3, rtol=1e-3)
    print("KERNEL_OK")
</pallas_src>

<mosaic_0001>
module attributes {stable_mosaic.version = 11 : i64} {
  func.func @_mixcfn_kernel(%arg0: i32, %arg1: memref<2x16x64xf32, #tpu.memory_space<vmem>>, %arg2: memref<3x64x128xf32, #tpu.memory_space<vmem>>, %arg3: memref<1x128xf32, #tpu.memory_space<vmem>>, %arg4: memref<3x128x128xf32, #tpu.memory_space<vmem>>, %arg5: memref<1x128xf32, #tpu.memory_space<vmem>>, %arg6: memref<2x16x128xf32, #tpu.memory_space<vmem>>, %arg7: memref<2x16x128xf32, #tpu.memory_space<vmem>>) attributes {dimension_semantics = [#tpu.dimension_semantics<parallel>], iteration_bounds = array<i64: 1>, scalar_prefetch = 0 : i64, scratch_operands = 1 : i64, tpu.core_type = #tpu.core_type<tc>, window_params = [{transform_indices = @transform_0, window_bounds = array<i64: 2, 16, 64>}, {pipeline_mode = #tpu.pipeline_mode<synchronous>, transform_indices = @transform_1, window_bounds = array<i64: 3, 64, 128>}, {pipeline_mode = #tpu.pipeline_mode<synchronous>, transform_indices = @transform_2, window_bounds = array<i64: 1, 128>}, {pipeline_mode = #tpu.pipeline_mode<synchronous>, transform_indices = @transform_3, window_bounds = array<i64: 3, 128, 128>}, {pipeline_mode = #tpu.pipeline_mode<synchronous>, transform_indices = @transform_4, window_bounds = array<i64: 1, 128>}, {transform_indices = @transform_5, window_bounds = array<i64: 2, 16, 128>}]} {
    %c0 = arith.constant 0 : index
    %c0_0 = arith.constant 0 : index
    %c0_1 = arith.constant 0 : index
    %0 = vector.load %arg1[%c0, %c0_0, %c0_1] : memref<2x16x64xf32, #tpu.memory_space<vmem>>, vector<2x16x64xf32>
    %1 = vector.shape_cast %0 : vector<2x16x64xf32> to vector<32x64xf32>
    %c1 = arith.constant 1 : index
    %c0_2 = arith.constant 0 : index
    %c0_3 = arith.constant 0 : index
    %2 = vector.load %arg2[%c1, %c0_2, %c0_3] : memref<3x64x128xf32, #tpu.memory_space<vmem>>, vector<1x64x128xf32>
    %3 = vector.shape_cast %2 : vector<1x64x128xf32> to vector<64x128xf32>
    %cst = arith.constant dense<0.000000e+00> : vector<32x128xf32>
    %4 = tpu.matmul %1, %3, %cst {dimension_numbers = #tpu.dot_dimension_numbers<[1], [0], [0], [1], [0, 0, 1, 1], [], []>} : vector<32x64xf32>, vector<64x128xf32>, vector<32x128xf32> -> vector<32x128xf32>
    %5 = vector.shape_cast %4 : vector<32x128xf32> to vector<2x16x128xf32>
    %c0_4 = arith.constant 0 : index
    %c0_5 = arith.constant 0 : index
    %c0_6 = arith.constant 0 : index
    %6 = vector.load %arg2[%c0_4, %c0_5, %c0_6] : memref<3x64x128xf32, #tpu.memory_space<vmem>>, vector<1x64x128xf32>
    %7 = vector.shape_cast %6 : vector<1x64x128xf32> to vector<64x128xf32>
    %cst_7 = arith.constant dense<0.000000e+00> : vector<32x128xf32>
    %8 = tpu.matmul %1, %7, %cst_7 {dimension_numbers = #tpu.dot_dimension_numbers<[1], [0], [0], [1], [0, 0, 1, 1], [], []>} : vector<32x64xf32>, vector<64x128xf32>, vector<32x128xf32> -> vector<32x128xf32>
    %9 = vector.shape_cast %8 : vector<32x128xf32> to vector<2x16x128xf32>
    %c2 = arith.constant 2 : index
    %c0_8 = arith.constant 0 : index
    %c0_9 = arith.constant 0 : index
    %10 = vector.load %arg2[%c2, %c0_8, %c0_9] : memref<3x64x128xf32, #tpu.memory_space<vmem>>, vector<1x64x128xf32>
    %11 = vector.shape_cast %10 : vector<1x64x128xf32> to vector<64x128xf32>
    %cst_10 = arith.constant dense<0.000000e+00> : vector<32x128xf32>
    %12 = tpu.matmul %1, %11, %cst_10 {dimension_numbers = #tpu.dot_dimension_numbers<[1], [0], [0], [1], [0, 0, 1, 1], [], []>} : vector<32x64xf32>, vector<64x128xf32>, vector<32x128xf32> -> vector<32x128xf32>
    %13 = vector.shape_cast %12 : vector<32x128xf32> to vector<2x16x128xf32>
    %c0_11 = arith.constant 0 : index
    %c0_12 = arith.constant 0 : index
    %14 = vector.load %arg3[%c0_11, %c0_12] : memref<1x128xf32, #tpu.memory_space<vmem>>, vector<1x128xf32>
    %15 = vector.shape_cast %14 : vector<1x128xf32> to vector<1x1x128xf32>
    %16 = vector.broadcast %15 : vector<1x1x128xf32> to vector<2x16x128xf32>
    %17 = arith.addf %16, %5 : vector<2x16x128xf32>
    %c0_13 = arith.constant 0 : index
    %c0_14 = arith.constant 0 : index
    %c0_15 = arith.constant 0 : index
    %18 = vector.load %arg7[%c0_13, %c0_14, %c0_15] : memref<2x16x128xf32, #tpu.memory_space<vmem>>, vector<2x16x128xf32>
    tpu.vector_store %arg7[%c0_13, %c0_14, %c0_15], %17 {strides = array<i32>} : memref<2x16x128xf32, #tpu.memory_space<vmem>>, vector<2x16x128xf32>,
    %c0_16 = arith.constant 0 : index
    %c1_17 = arith.constant 1 : index
    %c0_18 = arith.constant 0 : index
    %19 = vector.load %arg7[%c0_16, %c1_17, %c0_18] : memref<2x16x128xf32, #tpu.memory_space<vmem>>, vector<2x15x128xf32>
    %20 = vector.extract_strided_slice %9 {offsets = [0, 0, 0], sizes = [2, 15, 128], strides = [1, 1, 1]} : vector<2x16x128xf32> to vector<2x15x128xf32>
    %21 = arith.addf %19, %20 : vector<2x15x128xf32>
    %c0_19 = arith.constant 0 : index
    %c1_20 = arith.constant 1 : index
    %c0_21 = arith.constant 0 : index
    %22 = vector.load %arg7[%c0_19, %c1_20, %c0_21] : memref<2x16x128xf32, #tpu.memory_space<vmem>>, vector<2x15x128xf32>
    tpu.vector_store %arg7[%c0_19, %c1_20, %c0_21], %21 {strides = array<i32>} : memref<2x16x128xf32, #tpu.memory_space<vmem>>, vector<2x15x128xf32>,
    %c0_22 = arith.constant 0 : index
    %c0_23 = arith.constant 0 : index
    %c0_24 = arith.constant 0 : index
    %23 = vector.load %arg7[%c0_22, %c0_23, %c0_24] : memref<2x16x128xf32, #tpu.memory_space<vmem>>, vector<2x15x128xf32>
    %24 = vector.extract_strided_slice %13 {offsets = [0, 1, 0], sizes = [2, 15, 128], strides = [1, 1, 1]} : vector<2x16x128xf32> to vector<2x15x128xf32>
    %25 = arith.addf %23, %24 : vector<2x15x128xf32>
    %c0_25 = arith.constant 0 : index
    %c0_26 = arith.constant 0 : index
    %c0_27 = arith.constant 0 : index
    %26 = vector.load %arg7[%c0_25, %c0_26, %c0_27] : memref<2x16x128xf32, #tpu.memory_space<vmem>>, vector<2x15x128xf32>
    tpu.vector_store %arg7[%c0_25, %c0_26, %c0_27], %25 {strides = array<i32>} : memref<2x16x128xf32, #tpu.memory_space<vmem>>, vector<2x15x128xf32>,
    %c0_28 = arith.constant 0 : index
    %c0_29 = arith.constant 0 : index
    %c0_30 = arith.constant 0 : index
    %27 = vector.load %arg7[%c0_28, %c0_29, %c0_30] : memref<2x16x128xf32, #tpu.memory_space<vmem>>, vector<2x16x128xf32>
    %28 = vector.shape_cast %27 : vector<2x16x128xf32> to vector<32x128xf32>
    %c1_31 = arith.constant 1 : index
    %c0_32 = arith.constant 0 : index
    %c0_33 = arith.constant 0 : index
    %29 = vector.load %arg4[%c1_31, %c0_32, %c0_33] : memref<3x128x128xf32, #tpu.memory_space<vmem>>, vector<1x128x128xf32>
    %30 = vector.shape_cast %29 : vector<1x128x128xf32> to vector<128x128xf32>
    %cst_34 = arith.constant dense<0.000000e+00> : vector<32x128xf32>
    %31 = tpu.matmul %28, %30, %cst_34 {dimension_numbers = #tpu.dot_dimension_numbers<[1], [0], [0], [1], [0, 0, 1, 1], [], []>} : vector<32x128xf32>, vector<128x128xf32>, vector<32x128xf32> -> vector<32x128xf32>
    %32 = vector.shape_cast %31 : vector<32x128xf32> to vector<2x16x128xf32>
    %c0_35 = arith.constant 0 : index
    %c0_36 = arith.constant 0 : index
    %c0_37 = arith.constant 0 : index
    %33 = vector.load %arg4[%c0_35, %c0_36, %c0_37] : memref<3x128x128xf32, #tpu.memory_space<vmem>>, vector<1x128x128xf32>
    %34 = vector.shape_cast %33 : vector<1x128x128xf32> to vector<128x128xf32>
    %cst_38 = arith.constant dense<0.000000e+00> : vector<32x128xf32>
    %35 = tpu.matmul %28, %34, %cst_38 {dimension_numbers = #tpu.dot_dimension_numbers<[1], [0], [0], [1], [0, 0, 1, 1], [], []>} : vector<32x128xf32>, vector<128x128xf32>, vector<32x128xf32> -> vector<32x128xf32>
    %36 = vector.shape_cast %35 : vector<32x128xf32> to vector<2x16x128xf32>
    %c2_39 = arith.constant 2 : index
    %c0_40 = arith.constant 0 : index
    %c0_41 = arith.constant 0 : index
    %37 = vector.load %arg4[%c2_39, %c0_40, %c0_41] : memref<3x128x128xf32, #tpu.memory_space<vmem>>, vector<1x128x128xf32>
    %38 = vector.shape_cast %37 : vector<1x128x128xf32> to vector<128x128xf32>
    %cst_42 = arith.constant dense<0.000000e+00> : vector<32x128xf32>
    %39 = tpu.matmul %28, %38, %cst_42 {dimension_numbers = #tpu.dot_dimension_numbers<[1], [0], [0], [1], [0, 0, 1, 1], [], []>} : vector<32x128xf32>, vector<128x128xf32>, vector<32x128xf32> -> vector<32x128xf32>
    %40 = vector.shape_cast %39 : vector<32x128xf32> to vector<2x16x128xf32>
    %c0_43 = arith.constant 0 : index
    %c0_44 = arith.constant 0 : index
    %41 = vector.load %arg5[%c0_43, %c0_44] : memref<1x128xf32, #tpu.memory_space<vmem>>, vector<1x128xf32>
    %42 = vector.shape_cast %41 : vector<1x128xf32> to vector<1x1x128xf32>
    %43 = vector.broadcast %42 : vector<1x1x128xf32> to vector<2x16x128xf32>
    %44 = arith.addf %43, %32 : vector<2x16x128xf32>
    %c0_45 = arith.constant 0 : index
    %c0_46 = arith.constant 0 : index
    %c0_47 = arith.constant 0 : index
    %45 = vector.load %arg6[%c0_45, %c0_46, %c0_47] : memref<2x16x128xf32, #tpu.memory_space<vmem>>, vector<2x16x128xf32>
    tpu.vector_store %arg6[%c0_45, %c0_46, %c0_47], %44 {strides = array<i32>} : memref<2x16x128xf32, #tpu.memory_space<vmem>>, vector<2x16x128xf32>,
    %c0_48 = arith.constant 0 : index
    %c1_49 = arith.constant 1 : index
    %c0_50 = arith.constant 0 : index
    %46 = vector.load %arg6[%c0_48, %c1_49, %c0_50] : memref<2x16x128xf32, #tpu.memory_space<vmem>>, vector<2x15x128xf32>
    %47 = vector.extract_strided_slice %36 {offsets = [0, 0, 0], sizes = [2, 15, 128], strides = [1, 1, 1]} : vector<2x16x128xf32> to vector<2x15x128xf32>
    %48 = arith.addf %46, %47 : vector<2x15x128xf32>
    %c0_51 = arith.constant 0 : index
    %c1_52 = arith.constant 1 : index
    %c0_53 = arith.constant 0 : index
    %49 = vector.load %arg6[%c0_51, %c1_52, %c0_53] : memref<2x16x128xf32, #tpu.memory_space<vmem>>, vector<2x15x128xf32>
    tpu.vector_store %arg6[%c0_51, %c1_52, %c0_53], %48 {strides = array<i32>} : memref<2x16x128xf32, #tpu.memory_space<vmem>>, vector<2x15x128xf32>,
    %c0_54 = arith.constant 0 : index
    %c0_55 = arith.constant 0 : index
    %c0_56 = arith.constant 0 : index
    %50 = vector.load %arg6[%c0_54, %c0_55, %c0_56] : memref<2x16x128xf32, #tpu.memory_space<vmem>>, vector<2x15x128xf32>
    %51 = vector.extract_strided_slice %40 {offsets = [0, 1, 0], sizes = [2, 15, 128], strides = [1, 1, 1]} : vector<2x16x128xf32> to vector<2x15x128xf32>
    %52 = arith.addf %50, %51 : vector<2x15x128xf32>
    %c0_57 = arith.constant 0 : index
    %c0_58 = arith.constant 0 : index
    %c0_59 = arith.constant 0 : index
    %53 = vector.load %arg6[%c0_57, %c0_58, %c0_59] : memref<2x16x128xf32, #tpu.memory_space<vmem>>, vector<2x15x128xf32>
    tpu.vector_store %arg6[%c0_57, %c0_58, %c0_59], %52 {strides = array<i32>} : memref<2x16x128xf32, #tpu.memory_space<vmem>>, vector<2x15x128xf32>,
    %c0_60 = arith.constant 0 : index
    %c0_61 = arith.constant 0 : index
    %c0_62 = arith.constant 0 : index
    %54 = vector.load %arg6[%c0_60, %c0_61, %c0_62] : memref<2x16x128xf32, #tpu.memory_space<vmem>>, vector<2x16x128xf32>
    %cst_63 = arith.constant 0.000000e+00 : f32
    %55 = vector.broadcast %cst_63 : f32 to vector<2x16x128xf32>
    %56 = arith.maximumf %54, %55 : vector<2x16x128xf32>
    %c0_64 = arith.constant 0 : index
    %c0_65 = arith.constant 0 : index
    %c0_66 = arith.constant 0 : index
    %57 = vector.load %arg6[%c0_64, %c0_65, %c0_66] : memref<2x16x128xf32, #tpu.memory_space<vmem>>, vector<2x16x128xf32>
    tpu.vector_store %arg6[%c0_64, %c0_65, %c0_66], %56 {strides = array<i32>} : memref<2x16x128xf32, #tpu.memory_space<vmem>>, vector<2x16x128xf32>,
    return
  }
  func.func @transform_0(%arg0: i32) -> (i32, i32, i32) {
    %c0_i32 = arith.constant 0 : i32
    %c0_i32_0 = arith.constant 0 : i32
    %c0_i32_1 = arith.constant 0 : i32
    return %arg0, %c0_i32, %c0_i32_0 : i32, i32, i32
  }
  func.func @transform_1(%arg0: i32) -> (i32, i32, i32) {
    %c0_i32 = arith.constant 0 : i32
    %c0_i32_0 = arith.constant 0 : i32
    %c0_i32_1 = arith.constant 0 : i32
    %c0_i32_2 = arith.constant 0 : i32
    return %c0_i32, %c0_i32_0, %c0_i32_1 : i32, i32, i32
  }
  func.func @transform_2(%arg0: i32) -> (i32, i32) {
    %c0_i32 = arith.constant 0 : i32
    %c0_i32_0 = arith.constant 0 : i32
    %c0_i32_1 = arith.constant 0 : i32
    return %c0_i32, %c0_i32_0 : i32, i32
  }
  func.func @transform_3(%arg0: i32) -> (i32, i32, i32) {
    %c0_i32 = arith.constant 0 : i32
    %c0_i32_0 = arith.constant 0 : i32
    %c0_i32_1 = arith.constant 0 : i32
    %c0_i32_2 = arith.constant 0 : i32
    return %c0_i32, %c0_i32_0, %c0_i32_1 : i32, i32, i32
  }
  func.func @transform_4(%arg0: i32) -> (i32, i32) {
    %c0_i32 = arith.constant 0 : i32
    %c0_i32_0 = arith.constant 0 : i32
    %c0_i32_1 = arith.constant 0 : i32
    return %c0_i32, %c0_i32_0 : i32, i32
  }
  func.func @transform_5(%arg0: i32) -> (i32, i32, i32) {
    %c0_i32 = arith.constant 0 : i32
    %c0_i32_0 = arith.constant 0 : i32
    %c0_i32_1 = arith.constant 0 : i32
    return %arg0, %c0_i32, %c0_i32_0 : i32, i32, i32
  }
}

</mosaic_0001>

<llo_original>
// kernel: tpu_custom_call.1
$region0: #{tpu_custom_call.1}
  #allocation0 [shape = 'u32[]', space=smem, size = 0x4, offset = 0x4, fixed_abs, tag = 'smem constant byte address 0x4 - core index']
  #allocation1 [shape = 'u32[144,128]{1,0:T(1,128)}', space=vmem, size = 0x12000, scoped, tag = 'internal scratch']
  #allocation2 [shape = 'f32[2,16,128]{2,1,0:T(8,128)}', space=vmem, size = 0x4000, scoped, tag = 'scratch operand']
  %s0 = inlined_call_operand.hbm [shape: f32[2,16,64], index: 0, kind: input, shape index: {}]
  %s1 = inlined_call_operand.hbm [shape: f32[3,64,128], index: 1, kind: input, shape index: {}]
  %s2 = inlined_call_operand.vmem [shape: f32[1,128], index: 2, kind: input, shape index: {}]
  %s3 = inlined_call_operand.hbm [shape: f32[3,128,128], index: 3, kind: input, shape index: {}]
  %s4 = inlined_call_operand.vmem [shape: f32[1,128], index: 4, kind: input, shape index: {}]
  %s5 = inlined_call_operand.hbm [shape: f32[2,16,128], index: 5, kind: output, shape index: {}]
  %s6 = sld [smem:[#allocation0]]
  $region42: #{tpu_custom_call.1} parent=0
    _
  %s8 = ssub.s32 1, %s6
  %s9 = scalar_select 0, %s8, %s6
  $region1: #{tpu_custom_call.1} parent=0
    #allocation3 [shape = 'u8[16384]{0}', space=vmem, size = 0x4000, scoped, tag = 'input window, operand 0, single buffered']
    #allocation4 [shape = 's32[1]{0}', space=sflag, size = 0x4, scoped, tag = 'scoped memory for tpu_custom_call.1']
    #allocation5 [shape = 's32[1]{0}', space=sflag, size = 0x4, scoped, tag = 'scoped memory for tpu_custom_call.1']
    #allocation6 [shape = 'u8[98304]{0}', space=vmem, size = 0x18000, scoped, tag = 'input window, operand 1, single buffered']
    #allocation7 [shape = 's32[1]{0}', space=sflag, size = 0x4, scoped, tag = 'scoped memory for tpu_custom_call.1']
    #allocation8 [shape = 'u8[196608]{0}', space=vmem, size = 0x30000, scoped, tag = 'input window, operand 3, single buffered']
    #allocation9 [shape = 'u8[16384]{0}', space=vmem, size = 0x4000, scoped, tag = 'output window, operand 0, single buffered']
    %10 = vsyncpa [#allocation4], 0
    %11 = vsyncpa [#allocation7], 0
    %12 = vsyncpa [#allocation5], 0
    // Predicated region
    $region2: #{tpu_custom_call.1} parent=1 // pred_check
      _
    $region3: #{tpu_custom_call.1} parent=1 // pred_check_branch
      %14 = sbr.rel (0) target = $region5
    $region4: #{tpu_custom_call.1} parent=1 // pred_region
      %s16 = ssub.s32 512, 512
      %17 = vsyncadd [#allocation4], %s16
      %s18 = sshll.u32 [#allocation3], 4
      %s19 = int_to_ptr.vmem [resolvable:$true] %s18
      %24 = dma.hbm_to_vmem [thread:$0]  %s0, 512, %s19, [#allocation4], 128, 128, 8
    $region5: #{tpu_custom_call.1} parent=1 // pred_fallthru
      _
    // Predicated region
    $region6: #{tpu_custom_call.1} parent=1 // pred_check
      _
    $region7: #{tpu_custom_call.1} parent=1 // pred_check_branch
      %26 = sbr.rel (0) target = $region9
    $region8: #{tpu_custom_call.1} parent=1 // pred_region
      %s28 = ssub.s32 3072, 3072
      %29 = vsyncadd [#allocation7], %s28
      %s30 = sshll.u32 [#allocation6], 4
      %s31 = int_to_ptr.vmem [resolvable:$true] %s30
      %36 = dma.hbm_to_vmem [thread:$0]  %s1, 3072, %s31, [#allocation7], 128, 128, 8
    $region9: #{tpu_custom_call.1} parent=1 // pred_fallthru
      _
    // Predicated region
    $region10: #{tpu_custom_call.1} parent=1 // pred_check
      _
    $region11: #{tpu_custom_call.1} parent=1 // pred_check_branch
      %38 = sbr.rel (0) target = $region13
    $region12: #{tpu_custom_call.1} parent=1 // pred_region
      _
    $region13: #{tpu_custom_call.1} parent=1 // pred_fallthru
      _
    // Predicated region
    $region14: #{tpu_custom_call.1} parent=1 // pred_check
      _
    $region15: #{tpu_custom_call.1} parent=1 // pred_check_branch
      %40 = sbr.rel (0) target = $region17
    $region16: #{tpu_custom_call.1} parent=1 // pred_region
      %s42 = ssub.s32 6144, 6144
      %43 = vsyncadd [#allocation7], %s42
      %s44 = sshll.u32 [#allocation8], 4
      %s45 = int_to_ptr.vmem [resolvable:$true] %s44
      %50 = dma.hbm_to_vmem [thread:$0]  %s3, 6144, %s45, [#allocation7], 128, 128, 8
    $region17: #{tpu_custom_call.1} parent=1 // pred_fallthru
      _
    // Predicated region
    $region18: #{tpu_custom_call.1} parent=1 // pred_check
      _
    $region19: #{tpu_custom_call.1} parent=1 // pred_check_branch
      %52 = sbr.rel (0) target = $region21
    $region20: #{tpu_custom_call.1} parent=1 // pred_region
      _
    $region21: #{tpu_custom_call.1} parent=1 // pred_fallthru
      _
    // Predicated region
    $region22: #{tpu_custom_call.1} parent=1 // pred_check
      _
    $region23: #{tpu_custom_call.1} parent=1 // pred_check_branch
      %54 = sbr.rel (0) target = $region25
    $region24: #{tpu_custom_call.1} parent=1 // pred_region
      %55 = dma.done [#allocation4], 512
    $region25: #{tpu_custom_call.1} parent=1 // pred_fallthru
      _
    // Predicated region
    $region26: #{tpu_custom_call.1} parent=1 // pred_check
      _
    $region27: #{tpu_custom_call.1} parent=1 // pred_check_branch
      %57 = sbr.rel (0) target = $region29
    $region28: #{tpu_custom_call.1} parent=1 // pred_region
      %58 = dma.done [#allocation7], 3072
    $region29: #{tpu_custom_call.1} parent=1 // pred_fallthru
      _
    // Predicated region
    $region30: #{tpu_custom_call.1} parent=1 // pred_check
      _
    $region31: #{tpu_custom_call.1} parent=1 // pred_check_branch
      %60 = sbr.rel (0) target = $region33
    $region32: #{tpu_custom_call.1} parent=1 // pred_region
      %61 = dma.done [#allocation7], 6144
    $region33: #{tpu_custom_call.1} parent=1 // pred_fallthru
      _
    %v62 = vld [vmem:[#allocation3] sm:$0xff]
    %v63 = vld [vmem:[#allocation3 + $0x8] sm:$0xff]
    %v64 = vld [vmem:[#allocation3 + $0x10] sm:$0xff]
    %v65 = vld [vmem:[#allocation3 + $0x18] sm:$0xff]
    %s66 = scalar_lea.vmem [#allocation6], 64
    %v67 = vld [vmem:[%s66] sm:$0xff]
    %v68 = vld [vmem:[%s66 + $0x8] sm:$0xff]
    %v69 = vld [vmem:[%s66 + $0x10] sm:$0xff]
    %v70 = vld [vmem:[%s66 + $0x18] sm:$0xff]
    %v71 = vld [vmem:[%s66 + $0x20] sm:$0xff]
    %v72 = vld [vmem:[%s66 + $0x28] sm:$0xff]
    %v73 = vld [vmem:[%s66 + $0x30] sm:$0xff]
    %v74 = vld [vmem:[%s66 + $0x38] sm:$0xff]
    %vm75 = vcmask 523264
    %v77 = vsel %vm75, %v62, 0
    %v80 = vsel %vm75, %v63, 0
    %v83 = vsel %vm75, %v64, 0
    %v86 = vsel %vm75, %v65, 0
    %88 = vmatprep.subr.mxu0 0.0
    %89 = vmatpush1.msra.mxu0 %v67
    %90 = vmatprep.subr.mxu0 0.0
    %91 = vmatpush1.msra.mxu0 %v68
    %92 = vmatprep.subr.mxu0 0.0
    %93 = vmatpush1.msra.mxu0 %v69
    %94 = vmatprep.subr.mxu0 0.0
    %95 = vmatpush1.msra.mxu0 %v70
    %96 = vmatprep.subr.mxu0 0.0
    %97 = vmatpush1.msra.mxu0 %v71
    %98 = vmatprep.subr.mxu0 0.0
    %99 = vmatpush1.msra.mxu0 %v72
    %100 = vmatprep.subr.mxu0 0.0
    %101 = vmatpush1.msra.mxu0 %v73
    %102 = vmatprep.subr.mxu0 0.0
    %103 = vmatpush1.msra.mxu0 %v74
    %104 = vmatprep.subr.mxu0 0.0
    %105 = vmatpush1.msra.mxu0 0.0
    %106 = vmatprep.subr.mxu0 0.0
    %107 = vmatpush1.msra.mxu0 0.0
    %108 = vmatprep.subr.mxu0 0.0
    %109 = vmatpush1.msra.mxu0 0.0
    %110 = vmatprep.subr.mxu0 0.0
    %111 = vmatpush1.msra.mxu0 0.0
    %112 = vmatprep.subr.mxu0 0.0
    %113 = vmatpush1.msra.mxu0 0.0
    %114 = vmatprep.subr.mxu0 0.0
    %115 = vmatpush1.msra.mxu0 0.0
    %116 = vmatprep.subr.mxu0 0.0
    %117 = vmatpush1.msra.mxu0 0.0
    %118 = vmatprep.subr.mxu0 0.0
    %119 = vmatpush1.msra.mxu0 0.0
    %120 = vmatprep.subr.mxu0 0.0
    %121 = vmatpush1.msra.mxu0 0.0
    %122 = vmatprep.subr.mxu0 0.0
    %123 = vmatpush1.msra.mxu0 0.0
    %124 = vmatprep.subr.mxu0 0.0
    %125 = vmatpush1.msra.mxu0 0.0
    %126 = vmatprep.subr.mxu0 0.0
    %127 = vmatpush1.msra.mxu0 0.0
    %128 = vmatprep.subr.mxu0 0.0
    %129 = vmatpush1.msra.mxu0 0.0
    %130 = vmatprep.subr.mxu0 0.0
    %131 = vmatpush1.msra.mxu0 0.0
    %132 = vmatprep.subr.mxu0 0.0
    %133 = vmatpush1.msra.mxu0 0.0
    %134 = vmatprep.subr.mxu0 0.0
    %135 = vmatpush1.msra.mxu0 0.0
    %136 = vmatprep.subr.mxu0 0.0
    %137 = vmatpush1.msra.mxu0 0.0
    %138 = vmatprep.subr.mxu0 0.0
    %139 = vmatpush1.msra.mxu0 0.0
    %140 = vmatprep.subr.mxu0 0.0
    %141 = vmatpush1.msra.mxu0 0.0
    %142 = vmatprep.subr.mxu0 0.0
    %143 = vmatpush1.msra.mxu0 0.0
    %144 = vmatprep.subr.mxu0 0.0
    %145 = vmatpush1.msra.mxu0 0.0
    %146 = vmatprep.subr.mxu0 0.0
    %147 = vmatpush1.msra.mxu0 0.0
    %148 = vmatprep.subr.mxu0 0.0
    %149 = vmatpush1.msra.mxu0 0.0
    %150 = vmatprep.subr.mxu0 0.0
    %151 = vmatpush1.msra.mxu0 0.0
    %152 = vmatprep.mubr.f32.mxu0 0.0
    %153 = vmatmul.mubr.f32.gmra.mrb[0].mxu0 %v77
    %v154 = vpop.f32.mrb[0].mxu0
    %v155 = vadd.f32 0.0, %v154
    %v156 = vpop.f32.mrb[0].mxu0
    %157 = vmatprep.mubr.f32.mxu0 0.0
    %158 = vmatmul.mubr.f32.gmra.mrb[0].mxu0 %v80
    %v159 = vpop.f32.mrb[0].mxu0
    %v160 = vadd.f32 0.0, %v159
    %v161 = vpop.f32.mrb[0].mxu0
    %162 = vmatprep.mubr.f32.mxu0 0.0
    %163 = vmatmul.mubr.f32.gmra.mrb[0].mxu0 %v83
    %v164 = vpop.f32.mrb[0].mxu0
    %v165 = vadd.f32 0.0, %v164
    %v166 = vpop.f32.mrb[0].mxu0
    %167 = vmatprep.mubr.f32.mxu0 0.0
    %168 = vmatmul.mubr.f32.gmra.mrb[0].mxu0 %v86
    %v169 = vpop.f32.mrb[0].mxu0
    %v170 = vadd.f32 0.0, %v169
    %v171 = vpop.f32.mrb[0].mxu0
    %172 = vdwg.mxu0
    %v173 = vld [vmem:[#allocation6] sm:$0xff]
    %v174 = vld [vmem:[#allocation6 + $0x8] sm:$0xff]
    %v175 = vld [vmem:[#allocation6 + $0x10] sm:$0xff]
    %v176 = vld [vmem:[#allocation6 + $0x18] sm:$0xff]
    %v177 = vld [vmem:[#allocation6 + $0x20] sm:$0xff]
    %v178 = vld [vmem:[#allocation6 + $0x28] sm:$0xff]
    %v179 = vld [vmem:[#allocation6 + $0x30] sm:$0xff]
    %v180 = vld [vmem:[#allocation6 + $0x38] sm:$0xff]
    %181 = vmatprep.subr.mxu0 0.0
    %182 = vmatpush1.msra.mxu0 %v173
    %183 = vmatprep.subr.mxu0 0.0
    %184 = vmatpush1.msra.mxu0 %v174
    %185 = vmatprep.subr.mxu0 0.0
    %186 = vmatpush1.msra.mxu0 %v175
    %187 = vmatprep.subr.mxu0 0.0
    %188 = vmatpush1.msra.mxu0 %v176
    %189 = vmatprep.subr.mxu0 0.0
    %190 = vmatpush1.msra.mxu0 %v177
    %191 = vmatprep.subr.mxu0 0.0
    %192 = vmatpush1.msra.mxu0 %v178
    %193 = vmatprep.subr.mxu0 0.0
    %194 = vmatpush1.msra.mxu0 %v179
    %195 = vmatprep.subr.mxu0 0.0
    %196 = vmatpush1.msra.mxu0 %v180
    %197 = vmatprep.subr.mxu0 0.0
    %198 = vmatpush1.msra.mxu0 0.0
    %199 = vmatprep.subr.mxu0 0.0
    %200 = vmatpush1.msra.mxu0 0.0
    %201 = vmatprep.subr.mxu0 0.0
    %202 = vmatpush1.msra.mxu0 0.0
    %203 = vmatprep.subr.mxu0 0.0
    %204 = vmatpush1.msra.mxu0 0.0
    %205 = vmatprep.subr.mxu0 0.0
    %206 = vmatpush1.msra.mxu0 0.0
    %207 = vmatprep.subr.mxu0 0.0
    %208 = vmatpush1.msra.mxu0 0.0
    %209 = vmatprep.subr.mxu0 0.0
    %210 = vmatpush1.msra.mxu0 0.0
    %211 = vmatprep.subr.mxu0 0.0
    %212 = vmatpush1.msra.mxu0 0.0
    %213 = vmatprep.subr.mxu0 0.0
    %214 = vmatpush1.msra.mxu0 0.0
    %215 = vmatprep.subr.mxu0 0.0
    %216 = vmatpush1.msra.mxu0 0.0
    %217 = vmatprep.subr.mxu0 0.0
    %218 = vmatpush1.msra.mxu0 0.0
    %219 = vmatprep.subr.mxu0 0.0
    %220 = vmatpush1.msra.mxu0 0.0
    %221 = vmatprep.subr.mxu0 0.0
    %222 = vmatpush1.msra.mxu0 0.0
    %223 = vmatprep.subr.mxu0 0.0
    %224 = vmatpush1.msra.mxu0 0.0
    %225 = vmatprep.subr.mxu0 0.0
    %226 = vmatpush1.msra.mxu0 0.0
    %227 = vmatprep.subr.mxu0 0.0
    %228 = vmatpush1.msra.mxu0 0.0
    %229 = vmatprep.subr.mxu0 0.0
    %230 = vmatpush1.msra.mxu0 0.0
    %231 = vmatprep.subr.mxu0 0.0
    %232 = vmatpush1.msra.mxu0 0.0
    %233 = vmatprep.subr.mxu0 0.0
    %234 = vmatpush1.msra.mxu0 0.0
    %235 = vmatprep.subr.mxu0 0.0
    %236 = vmatpush1.msra.mxu0 0.0
    %237 = vmatprep.subr.mxu0 0.0
    %238 = vmatpush1.msra.mxu0 0.0
    %239 = vmatprep.subr.mxu0 0.0
    %240 = vmatpush1.msra.mxu0 0.0
    %241 = vmatprep.subr.mxu0 0.0
    %242 = vmatpush1.msra.mxu0 0.0
    %243 = vmatprep.subr.mxu0 0.0
    %244 = vmatpush1.msra.mxu0 0.0
    %245 = vmatprep.mubr.f32.mxu0 0.0
    %246 = vmatmul.mubr.f32.gmra.mrb[0].mxu0 %v77
    %v247 = vpop.f32.mrb[0].mxu0
    %v248 = vadd.f32 0.0, %v247
    %v249 = vpop.f32.mrb[0].mxu0
    %250 = vmatprep.mubr.f32.mxu0 0.0
    %251 = vmatmul.mubr.f32.gmra.mrb[0].mxu0 %v80
    %v252 = vpop.f32.mrb[0].mxu0
    %v253 = vadd.f32 0.0, %v252
    %v254 = vpop.f32.mrb[0].mxu0
    %255 = vmatprep.mubr.f32.mxu0 0.0
    %256 = vmatmul.mubr.f32.gmra.mrb[0].mxu0 %v83
    %v257 = vpop.f32.mrb[0].mxu0
    %v258 = vadd.f32 0.0, %v257
    %v259 = vpop.f32.mrb[0].mxu0
    %260 = vmatprep.mubr.f32.mxu0 0.0
    %261 = vmatmul.mubr.f32.gmra.mrb[0].mxu0 %v86
    %v262 = vpop.f32.mrb[0].mxu0
    %v263 = vadd.f32 0.0, %v262
    %v264 = vpop.f32.mrb[0].mxu0
    %265 = vdwg.mxu0
    %s266 = scalar_lea.vmem [#allocation6], 128
    %v267 = vld [vmem:[%s266] sm:$0xff]
    %v268 = vld [vmem:[%s266 + $0x8] sm:$0xff]
    %v269 = vld [vmem:[%s266 + $0x10] sm:$0xff]
    %v270 = vld [vmem:[%s266 + $0x18] sm:$0xff]
    %v271 = vld [vmem:[%s266 + $0x20] sm:$0xff]
    %v272 = vld [vmem:[%s266 + $0x28] sm:$0xff]
    %v273 = vld [vmem:[%s266 + $0x30] sm:$0xff]
    %v274 = vld [vmem:[%s266 + $0x38] sm:$0xff]
    %275 = vmatprep.subr.mxu0 0.0
    %276 = vmatpush1.msra.mxu0 %v267
    %277 = vmatprep.subr.mxu0 0.0
    %278 = vmatpush1.msra.mxu0 %v268
    %279 = vmatprep.subr.mxu0 0.0
    %280 = vmatpush1.msra.mxu0 %v269
    %281 = vmatprep.subr.mxu0 0.0
    %282 = vmatpush1.msra.mxu0 %v270
    %283 = vmatprep.subr.mxu0 0.0
    %284 = vmatpush1.msra.mxu0 %v271
    %285 = vmatprep.subr.mxu0 0.0
    %286 = vmatpush1.msra.mxu0 %v272
    %287 = vmatprep.subr.mxu0 0.0
    %288 = vmatpush1.msra.mxu0 %v273
    %289 = vmatprep.subr.mxu0 0.0
    %290 = vmatpush1.msra.mxu0 %v274
    %291 = vmatprep.subr.mxu0 0.0
    %292 = vmatpush1.msra.mxu0 0.0
    %293 = vmatprep.subr.mxu0 0.0
    %294 = vmatpush1.msra.mxu0 0.0
    %295 = vmatprep.subr.mxu0 0.0
    %296 = vmatpush1.msra.mxu0 0.0
    %297 = vmatprep.subr.mxu0 0.0
    %298 = vmatpush1.msra.mxu0 0.0
    %299 = vmatprep.subr.mxu0 0.0
    %300 = vmatpush1.msra.mxu0 0.0
    %301 = vmatprep.subr.mxu0 0.0
    %302 = vmatpush1.msra.mxu0 0.0
    %303 = vmatprep.subr.mxu0 0.0
    %304 = vmatpush1.msra.mxu0 0.0
    %305 = vmatprep.subr.mxu0 0.0
    %306 = vmatpush1.msra.mxu0 0.0
    %307 = vmatprep.subr.mxu0 0.0
    %308 = vmatpush1.msra.mxu0 0.0
    %309 = vmatprep.subr.mxu0 0.0
    %310 = vmatpush1.msra.mxu0 0.0
    %311 = vmatprep.subr.mxu0 0.0
    %312 = vmatpush1.msra.mxu0 0.0
    %313 = vmatprep.subr.mxu0 0.0
    %314 = vmatpush1.msra.mxu0 0.0
    %315 = vmatprep.subr.mxu0 0.0
    %316 = vmatpush1.msra.mxu0 0.0
    %317 = vmatprep.subr.mxu0 0.0
    %318 = vmatpush1.msra.mxu0 0.0
    %319 = vmatprep.subr.mxu0 0.0
    %320 = vmatpush1.msra.mxu0 0.0
    %321 = vmatprep.subr.mxu0 0.0
    %322 = vmatpush1.msra.mxu0 0.0
    %323 = vmatprep.subr.mxu0 0.0
    %324 = vmatpush1.msra.mxu0 0.0
    %325 = vmatprep.subr.mxu0 0.0
    %326 = vmatpush1.msra.mxu0 0.0
    %327 = vmatprep.subr.mxu0 0.0
    %328 = vmatpush1.msra.mxu0 0.0
    %329 = vmatprep.subr.mxu0 0.0
    %330 = vmatpush1.msra.mxu0 0.0
    %331 = vmatprep.subr.mxu0 0.0
    %332 = vmatpush1.msra.mxu0 0.0
    %333 = vmatprep.subr.mxu0 0.0
    %334 = vmatpush1.msra.mxu0 0.0
    %335 = vmatprep.subr.mxu0 0.0
    %336 = vmatpush1.msra.mxu0 0.0
    %337 = vmatprep.subr.mxu0 0.0
    %338 = vmatpush1.msra.mxu0 0.0
    %339 = vmatprep.mubr.f32.mxu0 0.0
    %340 = vmatmul.mubr.f32.gmra.mrb[0].mxu0 %v77
    %v341 = vpop.f32.mrb[0].mxu0
    %v342 = vadd.f32 0.0, %v341
    %v343 = vpop.f32.mrb[0].mxu0
    %344 = vmatprep.mubr.f32.mxu0 0.0
    %345 = vmatmul.mubr.f32.gmra.mrb[0].mxu0 %v80
    %v346 = vpop.f32.mrb[0].mxu0
    %v347 = vadd.f32 0.0, %v346
    %v348 = vpop.f32.mrb[0].mxu0
    %349 = vmatprep.mubr.f32.mxu0 0.0
    %350 = vmatmul.mubr.f32.gmra.mrb[0].mxu0 %v83
    %v351 = vpop.f32.mrb[0].mxu0
    %v352 = vadd.f32 0.0, %v351
    %v353 = vpop.f32.mrb[0].mxu0
    %354 = vmatprep.mubr.f32.mxu0 0.0
    %355 = vmatmul.mubr.f32.gmra.mrb[0].mxu0 %v86
    %v356 = vpop.f32.mrb[0].mxu0
    %v357 = vadd.f32 0.0, %v356
    %v358 = vpop.f32.mrb[0].mxu0
    %359 = vdwg.mxu0
    %v360 = vld [vmem:[%s2] sm:$0x1]
    %v362 = vlaneseq
    %v363 = vshrl.u32 %v362, 7
    %v364 = vsub.s32 0, %v363
    %v365 = vrot.slane %v360, %v364
    %v367 = vadd.f32 %v365, %v155
    %v368 = vadd.f32 %v365, %v160
    %v369 = vadd.f32 %v365, %v165
    %v370 = vadd.f32 %v365, %v170
    %371 = vst [vmem:[#allocation2] sm:$0xff] %v367
    %372 = vst [vmem:[#allocation2 + $0x8] sm:$0xff] %v368
    %373 = vst [vmem:[#allocation2 + $0x10] sm:$0xff] %v369
    %374 = vst [vmem:[#allocation2 + $0x18] sm:$0xff] %v370
    %v375 = vld [vmem:[#allocation2 + $0x1] sm:$0xff]
    %v376 = vld [vmem:[#allocation2 + $0x9] sm:$0x7f]
    %v377 = vld [vmem:[#allocation2 + $0x11] sm:$0xff]
    %v378 = vld [vmem:[#allocation2 + $0x19] sm:$0x7f]
    %v379 = vadd.f32 %v375, %v248
    %v380 = vadd.f32 %v376, %v253
    %v381 = vadd.f32 %v377, %v258
    %v382 = vadd.f32 %v378, %v263
    %383 = vst [vmem:[#allocation2 + $0x1] sm:$0xff] %v379
    %384 = vst [vmem:[#allocation2 + $0x9] sm:$0x7f] %v380
    %385 = vst [vmem:[#allocation2 + $0x11] sm:$0xff] %v381
    %386 = vst [vmem:[#allocation2 + $0x19] sm:$0x7f] %v382
    %v387 = vld [vmem:[#allocation2] sm:$0xff]
    %v388 = vld [vmem:[#allocation2 + $0x8] sm:$0x7f]
    %v389 = vld [vmem:[#allocation2 + $0x10] sm:$0xff]
    %v390 = vld [vmem:[#allocation2 + $0x18] sm:$0x7f]
    %vm395 = vcmask 1046528
    %v396 = vrot.slane %v342, 1
    %v397 = vrot.slane %v347, 1
    %v398 = vsel %vm395, %v396, %v397
    %v399 = vrot.slane %v352, 1
    %v400 = vrot.slane %v357, 1
    %v401 = vsel %vm395, %v399, %v400
    %v406 = vadd.f32 %v387, %v398
    %v407 = vadd.f32 %v388, %v397
    %v408 = vadd.f32 %v389, %v401
    %v409 = vadd.f32 %v390, %v400
    %410 = vst [vmem:[#allocation2] sm:$0xff] %v406
    %411 = vst [vmem:[#allocation2 + $0x8] sm:$0x7f] %v407
    %412 = vst [vmem:[#allocation2 + $0x10] sm:$0xff] %v408
    %413 = vst [vmem:[#allocation2 + $0x18] sm:$0x7f] %v409
    %v414 = vld [vmem:[#allocation2] sm:$0xff]
    %v415 = vld [vmem:[#allocation2 + $0x8] sm:$0xff]
    %v416 = vld [vmem:[#allocation2 + $0x10] sm:$0xff]
    %v417 = vld [vmem:[#allocation2 + $0x18] sm:$0xff]
    %s418 = scalar_lea.vmem [#allocation8], 128
    %v419 = vld [vmem:[%s418] sm:$0xff]
    %v420 = vld [vmem:[%s418 + $0x8] sm:$0xff]
    %v421 = vld [vmem:[%s418 + $0x10] sm:$0xff]
    %v422 = vld [vmem:[%s418 + $0x18] sm:$0xff]
    %v423 = vld [vmem:[%s418 + $0x20] sm:$0xff]
    %v424 = vld [vmem:[%s418 + $0x28] sm:$0xff]
    %v425 = vld [vmem:[%s418 + $0x30] sm:$0xff]
    %v426 = vld [vmem:[%s418 + $0x38] sm:$0xff]
    %v427 = vld [vmem:[%s418 + $0x40] sm:$0xff]
    %v428 = vld [vmem:[%s418 + $0x48] sm:$0xff]
    %v429 = vld [vmem:[%s418 + $0x50] sm:$0xff]
    %v430 = vld [vmem:[%s418 + $0x58] sm:$0xff]
    %v431 = vld [vmem:[%s418 + $0x60] sm:$0xff]
    %v432 = vld [vmem:[%s418 + $0x68] sm:$0xff]
    %v433 = vld [vmem:[%s418 + $0x70] sm:$0xff]
    %v434 = vld [vmem:[%s418 + $0x78] sm:$0xff]
    %435 = vmatprep.subr.mxu0 0.0
    %436 = vmatpush1.msra.mxu0 %v419
    %437 = vmatprep.subr.mxu0 0.0
    %438 = vmatpush1.msra.mxu0 %v420
    %439 = vmatprep.subr.mxu0 0.0
    %440 = vmatpush1.msra.mxu0 %v421
    %441 = vmatprep.subr.mxu0 0.0
    %442 = vmatpush1.msra.mxu0 %v422
    %443 = vmatprep.subr.mxu0 0.0
    %444 = vmatpush1.msra.mxu0 %v423
    %445 = vmatprep.subr.mxu0 0.0
    %446 = vmatpush1.msra.mxu0 %v424
    %447 = vmatprep.subr.mxu0 0.0
    %448 = vmatpush1.msra.mxu0 %v425
    %449 = vmatprep.subr.mxu0 0.0
    %450 = vmatpush1.msra.mxu0 %v426
    %451 = vmatprep.subr.mxu0 0.0
    %452 = vmatpush1.msra.mxu0 %v427
    %453 = vmatprep.subr.mxu0 0.0
    %454 = vmatpush1.msra.mxu0 %v428
    %455 = vmatprep.subr.mxu0 0.0
    %456 = vmatpush1.msra.mxu0 %v429
    %457 = vmatprep.subr.mxu0 0.0
    %458 = vmatpush1.msra.mxu0 %v430
    %459 = vmatprep.subr.mxu0 0.0
    %460 = vmatpush1.msra.mxu0 %v431
    %461 = vmatprep.subr.mxu0 0.0
    %462 = vmatpush1.msra.mxu0 %v432
    %463 = vmatprep.subr.mxu0 0.0
    %464 = vmatpush1.msra.mxu0 %v433
    %465 = vmatprep.subr.mxu0 0.0
    %466 = vmatpush1.msra.mxu0 %v434
    %467 = vmatprep.subr.mxu0 0.0
    %468 = vmatpush1.msra.mxu0 0.0
    %469 = vmatprep.subr.mxu0 0.0
    %470 = vmatpush1.msra.mxu0 0.0
    %471 = vmatprep.subr.mxu0 0.0
    %472 = vmatpush1.msra.mxu0 0.0
    %473 = vmatprep.subr.mxu0 0.0
    %474 = vmatpush1.msra.mxu0 0.0
    %475 = vmatprep.subr.mxu0 0.0
    %476 = vmatpush1.msra.mxu0 0.0
    %477 = vmatprep.subr.mxu0 0.0
    %478 = vmatpush1.msra.mxu0 0.0
    %479 = vmatprep.subr.mxu0 0.0
    %480 = vmatpush1.msra.mxu0 0.0
    %481 = vmatprep.subr.mxu0 0.0
    %482 = vmatpush1.msra.mxu0 0.0
    %483 = vmatprep.subr.mxu0 0.0
    %484 = vmatpush1.msra.mxu0 0.0
    %485 = vmatprep.subr.mxu0 0.0
    %486 = vmatpush1.msra.mxu0 0.0
    %487 = vmatprep.subr.mxu0 0.0
    %488 = vmatpush1.msra.mxu0 0.0
    %489 = vmatprep.subr.mxu0 0.0
    %490 = vmatpush1.msra.mxu0 0.0
    %491 = vmatprep.subr.mxu0 0.0
    %492 = vmatpush1.msra.mxu0 0.0
    %493 = vmatprep.subr.mxu0 0.0
    %494 = vmatpush1.msra.mxu0 0.0
    %495 = vmatprep.subr.mxu0 0.0
    %496 = vmatpush1.msra.mxu0 0.0
    %497 = vmatprep.subr.mxu0 0.0
    %498 = vmatpush1.msra.mxu0 0.0
    %499 = vmatprep.mubr.f32.mxu0 0.0
    %500 = vmatmul.mubr.f32.gmra.mrb[0].mxu0 %v414
    %v501 = vpop.f32.mrb[0].mxu0
    %v502 = vadd.f32 0.0, %v501
    %v503 = vpop.f32.mrb[0].mxu0
    %504 = vmatprep.mubr.f32.mxu0 0.0
    %505 = vmatmul.mubr.f32.gmra.mrb[0].mxu0 %v415
    %v506 = vpop.f32.mrb[0].mxu0
    %v507 = vadd.f32 0.0, %v506
    %v508 = vpop.f32.mrb[0].mxu0
    %509 = vmatprep.mubr.f32.mxu0 0.0
    %510 = vmatmul.mubr.f32.gmra.mrb[0].mxu0 %v416
    %v511 = vpop.f32.mrb[0].mxu0
    %v512 = vadd.f32 0.0, %v511
    %v513 = vpop.f32.mrb[0].mxu0
    %514 = vmatprep.mubr.f32.mxu0 0.0
    %515 = vmatmul.mubr.f32.gmra.mrb[0].mxu0 %v417
    %v516 = vpop.f32.mrb[0].mxu0
    %v517 = vadd.f32 0.0, %v516
    %v518 = vpop.f32.mrb[0].mxu0
    %519 = vdwg.mxu0
    %v520 = vld [vmem:[#allocation8] sm:$0xff]
    %v521 = vld [vmem:[#allocation8 + $0x8] sm:$0xff]
    %v522 = vld [vmem:[#allocation8 + $0x10] sm:$0xff]
    %v523 = vld [vmem:[#allocation8 + $0x18] sm:$0xff]
    %v524 = vld [vmem:[#allocation8 + $0x20] sm:$0xff]
    %v525 = vld [vmem:[#allocation8 + $0x28] sm:$0xff]
    %v526 = vld [vmem:[#allocation8 + $0x30] sm:$0xff]
    %v527 = vld [vmem:[#allocation8 + $0x38] sm:$0xff]
    %v528 = vld [vmem:[#allocation8 + $0x40] sm:$0xff]
    %v529 = vld [vmem:[#allocation8 + $0x48] sm:$0xff]
    %v530 = vld [vmem:[#allocation8 + $0x50] sm:$0xff]
    %v531 = vld [vmem:[#allocation8 + $0x58] sm:$0xff]
    %v532 = vld [vmem:[#allocation8 + $0x60] sm:$0xff]
    %v533 = vld [vmem:[#allocation8 + $0x68] sm:$0xff]
    %v534 = vld [vmem:[#allocation8 + $0x70] sm:$0xff]
    %v535 = vld [vmem:[#allocation8 + $0x78] sm:$0xff]
    %536 = vmatprep.subr.mxu0 0.0
    %537 = vmatpush1.msra.mxu0 %v520
    %538 = vmatprep.subr.mxu0 0.0
    %539 = vmatpush1.msra.mxu0 %v521
    %540 = vmatprep.subr.mxu0 0.0
    %541 = vmatpush1.msra.mxu0 %v522
    %542 = vmatprep.subr.mxu0 0.0
    %543 = vmatpush1.msra.mxu0 %v523
    %544 = vmatprep.subr.mxu0 0.0
    %545 = vmatpush1.msra.mxu0 %v524
    %546 = vmatprep.subr.mxu0 0.0
    %547 = vmatpush1.msra.mxu0 %v525
    %548 = vmatprep.subr.mxu0 0.0
    %549 = vmatpush1.msra.mxu0 %v526
    %550 = vmatprep.subr.mxu0 0.0
    %551 = vmatpush1.msra.mxu0 %v527
    %552 = vmatprep.subr.mxu0 0.0
    %553 = vmatpush1.msra.mxu0 %v528
    %554 = vmatprep.subr.mxu0 0.0
    %555 = vmatpush1.msra.mxu0 %v529
    %556 = vmatprep.subr.mxu0 0.0
    %557 = vmatpush1.msra.mxu0 %v530
    %558 = vmatprep.subr.mxu0 0.0
    %559 = vmatpush1.msra.mxu0 %v531
    %560 = vmatprep.subr.mxu0 0.0
    %561 = vmatpush1.msra.mxu0 %v532
    %562 = vmatprep.subr.mxu0 0.0
    %563 = vmatpush1.msra.mxu0 %v533
    %564 = vmatprep.subr.mxu0 0.0
    %565 = vmatpush1.msra.mxu0 %v534
    %566 = vmatprep.subr.mxu0 0.0
    %567 = vmatpush1.msra.mxu0 %v535
    %568 = vmatprep.subr.mxu0 0.0
    %569 = vmatpush1.msra.mxu0 0.0
    %570 = vmatprep.subr.mxu0 0.0
    %571 = vmatpush1.msra.mxu0 0.0
    %572 = vmatprep.subr.mxu0 0.0
    %573 = vmatpush1.msra.mxu0 0.0
    %574 = vmatprep.subr.mxu0 0.0
    %575 = vmatpush1.msra.mxu0 0.0
    %576 = vmatprep.subr.mxu0 0.0
    %577 = vmatpush1.msra.mxu0 0.0
    %578 = vmatprep.subr.mxu0 0.0
    %579 = vmatpush1.msra.mxu0 0.0
    %580 = vmatprep.subr.mxu0 0.0
    %581 = vmatpush1.msra.mxu0 0.0
    %582 = vmatprep.subr.mxu0 0.0
    %583 = vmatpush1.msra.mxu0 0.0
    %584 = vmatprep.subr.mxu0 0.0
    %585 = vmatpush1.msra.mxu0 0.0
    %586 = vmatprep.subr.mxu0 0.0
    %587 = vmatpush1.msra.mxu0 0.0
    %588 = vmatprep.subr.mxu0 0.0
    %589 = vmatpush1.msra.mxu0 0.0
    %590 = vmatprep.subr.mxu0 0.0
    %591 = vmatpush1.msra.mxu0 0.0
    %592 = vmatprep.subr.mxu0 0.0
    %593 = vmatpush1.msra.mxu0 0.0
    %594 = vmatprep.subr.mxu0 0.0
    %595 = vmatpush1.msra.mxu0 0.0
    %596 = vmatprep.subr.mxu0 0.0
    %597 = vmatpush1.msra.mxu0 0.0
    %598 = vmatprep.subr.mxu0 0.0
    %599 = vmatpush1.msra.mxu0 0.0
    %600 = vmatprep.mubr.f32.mxu0 0.0
    %601 = vmatmul.mubr.f32.gmra.mrb[0].mxu0 %v414
    %v602 = vpop.f32.mrb[0].mxu0
    %v603 = vadd.f32 0.0, %v602
    %v604 = vpop.f32.mrb[0].mxu0
    %605 = vmatprep.mubr.f32.mxu0 0.0
    %606 = vmatmul.mubr.f32.gmra.mrb[0].mxu0 %v415
    %v607 = vpop.f32.mrb[0].mxu0
    %v608 = vadd.f32 0.0, %v607
    %v609 = vpop.f32.mrb[0].mxu0
    %610 = vmatprep.mubr.f32.mxu0 0.0
    %611 = vmatmul.mubr.f32.gmra.mrb[0].mxu0 %v416
    %v612 = vpop.f32.mrb[0].mxu0
    %v613 = vadd.f32 0.0, %v612
    %v614 = vpop.f32.mrb[0].mxu0
    %615 = vmatprep.mubr.f32.mxu0 0.0
    %616 = vmatmul.mubr.f32.gmra.mrb[0].mxu0 %v417
    %v617 = vpop.f32.mrb[0].mxu0
    %v618 = vadd.f32 0.0, %v617
    %v619 = vpop.f32.mrb[0].mxu0
    %620 = vdwg.mxu0
    %s621 = scalar_lea.vmem [#allocation8], 256
    %v622 = vld [vmem:[%s621] sm:$0xff]
    %v623 = vld [vmem:[%s621 + $0x8] sm:$0xff]
    %v624 = vld [vmem:[%s621 + $0x10] sm:$0xff]
    %v625 = vld [vmem:[%s621 + $0x18] sm:$0xff]
    %v626 = vld [vmem:[%s621 + $0x20] sm:$0xff]
    %v627 = vld [vmem:[%s621 + $0x28] sm:$0xff]
    %v628 = vld [vmem:[%s621 + $0x30] sm:$0xff]
    %v629 = vld [vmem:[%s621 + $0x38] sm:$0xff]
    %v630 = vld [vmem:[%s621 + $0x40] sm:$0xff]
    %v631 = vld [vmem:[%s621 + $0x48] sm:$0xff]
    %v632 = vld [vmem:[%s621 + $0x50] sm:$0xff]
    %v633 = vld [vmem:[%s621 + $0x58] sm:$0xff]
    %v634 = vld [vmem:[%s621 + $0x60] sm:$0xff]
    %v635 = vld [vmem:[%s621 + $0x68] sm:$0xff]
    %v636 = vld [vmem:[%s621 + $0x70] sm:$0xff]
    %v637 = vld [vmem:[%s621 + $0x78] sm:$0xff]
    %638 = vmatprep.subr.mxu0 0.0
    %639 = vmatpush1.msra.mxu0 %v622
    %640 = vmatprep.subr.mxu0 0.0
    %641 = vmatpush1.msra.mxu0 %v623
    %642 = vmatprep.subr.mxu0 0.0
    %643 = vmatpush1.msra.mxu0 %v624
    %644 = vmatprep.subr.mxu0 0.0
    %645 = vmatpush1.msra.mxu0 %v625
    %646 = vmatprep.subr.mxu0 0.0
    %647 = vmatpush1.msra.mxu0 %v626
    %648 = vmatprep.subr.mxu0 0.0
    %649 = vmatpush1.msra.mxu0 %v627
    %650 = vmatprep.subr.mxu0 0.0
    %651 = vmatpush1.msra.mxu0 %v628
    %652 = vmatprep.subr.mxu0 0.0
    %653 = vmatpush1.msra.mxu0 %v629
    %654 = vmatprep.subr.mxu0 0.0
    %655 = vmatpush1.msra.mxu0 %v630
    %656 = vmatprep.subr.mxu0 0.0
    %657 = vmatpush1.msra.mxu0 %v631
    %658 = vmatprep.subr.mxu0 0.0
    %659 = vmatpush1.msra.mxu0 %v632
    %660 = vmatprep.subr.mxu0 0.0
    %661 = vmatpush1.msra.mxu0 %v633
    %662 = vmatprep.subr.mxu0 0.0
    %663 = vmatpush1.msra.mxu0 %v634
    %664 = vmatprep.subr.mxu0 0.0
    %665 = vmatpush1.msra.mxu0 %v635
    %666 = vmatprep.subr.mxu0 0.0
    %667 = vmatpush1.msra.mxu0 %v636
    %668 = vmatprep.subr.mxu0 0.0
    %669 = vmatpush1.msra.mxu0 %v637
    %670 = vmatprep.subr.mxu0 0.0
    %671 = vmatpush1.msra.mxu0 0.0
    %672 = vmatprep.subr.mxu0 0.0
    %673 = vmatpush1.msra.mxu0 0.0
    %674 = vmatprep.subr.mxu0 0.0
    %675 = vmatpush1.msra.mxu0 0.0
    %676 = vmatprep.subr.mxu0 0.0
    %677 = vmatpush1.msra.mxu0 0.0
    %678 = vmatprep.subr.mxu0 0.0
    %679 = vmatpush1.msra.mxu0 0.0
    %680 = vmatprep.subr.mxu0 0.0
    %681 = vmatpush1.msra.mxu0 0.0
    %682 = vmatprep.subr.mxu0 0.0
    %683 = vmatpush1.msra.mxu0 0.0
    %684 = vmatprep.subr.mxu0 0.0
    %685 = vmatpush1.msra.mxu0 0.0
    %686 = vmatprep.subr.mxu0 0.0
    %687 = vmatpush1.msra.mxu0 0.0
    %688 = vmatprep.subr.mxu0 0.0
    %689 = vmatpush1.msra.mxu0 0.0
    %690 = vmatprep.subr.mxu0 0.0
    %691 = vmatpush1.msra.mxu0 0.0
    %692 = vmatprep.subr.mxu0 0.0
    %693 = vmatpush1.msra.mxu0 0.0
    %694 = vmatprep.subr.mxu0 0.0
    %695 = vmatpush1.msra.mxu0 0.0
    %696 = vmatprep.subr.mxu0 0.0
    %697 = vmatpush1.msra.mxu0 0.0
    %698 = vmatprep.subr.mxu0 0.0
    %699 = vmatpush1.msra.mxu0 0.0
    %700 = vmatprep.subr.mxu0 0.0
    %701 = vmatpush1.msra.mxu0 0.0
    %702 = vmatprep.mubr.f32.mxu0 0.0
    %703 = vmatmul.mubr.f32.gmra.mrb[0].mxu0 %v414
    %v704 = vpop.f32.mrb[0].mxu0
    %v705 = vadd.f32 0.0, %v704
    %v706 = vpop.f32.mrb[0].mxu0
    %707 = vmatprep.mubr.f32.mxu0 0.0
    %708 = vmatmul.mubr.f32.gmra.mrb[0].mxu0 %v415
    %v709 = vpop.f32.mrb[0].mxu0
    %v710 = vadd.f32 0.0, %v709
    %v711 = vpop.f32.mrb[0].mxu0
    %712 = vmatprep.mubr.f32.mxu0 0.0
    %713 = vmatmul.mubr.f32.gmra.mrb[0].mxu0 %v416
    %v714 = vpop.f32.mrb[0].mxu0
    %v715 = vadd.f32 0.0, %v714
    %v716 = vpop.f32.mrb[0].mxu0
    %717 = vmatprep.mubr.f32.mxu0 0.0
    %718 = vmatmul.mubr.f32.gmra.mrb[0].mxu0 %v417
    %v719 = vpop.f32.mrb[0].mxu0
    %v720 = vadd.f32 0.0, %v719
    %v721 = vpop.f32.mrb[0].mxu0
    %722 = vdwg.mxu0
    %v723 = vld [vmem:[%s4] sm:$0x1]
    %v725 = vlaneseq
    %v726 = vshrl.u32 %v725, 7
    %v727 = vsub.s32 0, %v726
    %v728 = vrot.slane %v723, %v727
    %v730 = vadd.f32 %v728, %v502
    %v731 = vadd.f32 %v728, %v507
    %v732 = vadd.f32 %v728, %v512
    %v733 = vadd.f32 %v728, %v517
    %734 = vst [vmem:[#allocation9] sm:$0xff] %v730
    %735 = vst [vmem:[#allocation9 + $0x8] sm:$0xff] %v731
    %736 = vst [vmem:[#allocation9 + $0x10] sm:$0xff] %v732
    %737 = vst [vmem:[#allocation9 + $0x18] sm:$0xff] %v733
    %v738 = vld [vmem:[#allocation9 + $0x1] sm:$0xff]
    %v739 = vld [vmem:[#allocation9 + $0x9] sm:$0x7f]
    %v740 = vld [vmem:[#allocation9 + $0x11] sm:$0xff]
    %v741 = vld [vmem:[#allocation9 + $0x19] sm:$0x7f]
    %v742 = vadd.f32 %v738, %v603
    %v743 = vadd.f32 %v739, %v608
    %v744 = vadd.f32 %v740, %v613
    %v745 = vadd.f32 %v741, %v618
    %746 = vst [vmem:[#allocation9 + $0x1] sm:$0xff] %v742
    %747 = vst [vmem:[#allocation9 + $0x9] sm:$0x7f] %v743
    %748 = vst [vmem:[#allocation9 + $0x11] sm:$0xff] %v744
    %749 = vst [vmem:[#allocation9 + $0x19] sm:$0x7f] %v745
    %v750 = vld [vmem:[#allocation9] sm:$0xff]
    %v751 = vld [vmem:[#allocation9 + $0x8] sm:$0x7f]
    %v752 = vld [vmem:[#allocation9 + $0x10] sm:$0xff]
    %v753 = vld [vmem:[#allocation9 + $0x18] sm:$0x7f]
    %v758 = vrot.slane %v705, 1
    %v759 = vrot.slane %v710, 1
    %v760 = vsel %vm395, %v758, %v759
    %v761 = vrot.slane %v715, 1
    %v762 = vrot.slane %v720, 1
    %v763 = vsel %vm395, %v761, %v762
    %v768 = vadd.f32 %v750, %v760
    %v769 = vadd.f32 %v751, %v759
    %v770 = vadd.f32 %v752, %v763
    %v771 = vadd.f32 %v753, %v762
    %772 = vst [vmem:[#allocation9] sm:$0xff] %v768
    %773 = vst [vmem:[#allocation9 + $0x8] sm:$0x7f] %v769
    %774 = vst [vmem:[#allocation9 + $0x10] sm:$0xff] %v770
    %775 = vst [vmem:[#allocation9 + $0x18] sm:$0x7f] %v771
    %v776 = vld [vmem:[#allocation9] sm:$0xff]
    %v777 = vld [vmem:[#allocation9 + $0x8] sm:$0xff]
    %v778 = vld [vmem:[#allocation9 + $0x10] sm:$0xff]
    %v779 = vld [vmem:[#allocation9 + $0x18] sm:$0xff]
    %v780 = vmax.f32 %v776, 0.0
    %v781 = vmax.f32 %v777, 0.0
    %v782 = vmax.f32 %v778, 0.0
    %v783 = vmax.f32 %v779, 0.0
    %784 = vst [vmem:[#allocation9] sm:$0xff] %v780
    %785 = vst [vmem:[#allocation9 + $0x8] sm:$0xff] %v781
    %786 = vst [vmem:[#allocation9 + $0x10] sm:$0xff] %v782
    %787 = vst [vmem:[#allocation9 + $0x18] sm:$0xff] %v783
    // Predicated region
    $region34: #{tpu_custom_call.1} parent=1 // pred_check
      _
    $region35: #{tpu_custom_call.1} parent=1 // pred_check_branch
      %789 = sbr.rel (0) target = $region37
    $region36: #{tpu_custom_call.1} parent=1 // pred_region
      %s791 = ssub.s32 512, 512
      %792 = vsyncadd [#allocation5], %s791
      %s793 = sshll.u32 [#allocation9], 4
      %s794 = int_to_ptr.vmem [resolvable:$true] %s793
      %799 = dma.vmem_to_hbm [thread:$0]  %s794, 512, %s5, [#allocation5], 128, 128, 8
    $region37: #{tpu_custom_call.1} parent=1 // pred_fallthru
      _
    // Predicated region
    $region38: #{tpu_custom_call.1} parent=1 // pred_check
      _
    $region39: #{tpu_custom_call.1} parent=1 // pred_check_branch
      %801 = sbr.rel (0) target = $region41
    $region40: #{tpu_custom_call.1} parent=1 // pred_region
      %802 = dma.done [#allocation5], 512
    $region41: #{tpu_custom_call.1} parent=1 // pred_fallthru
      _
    %803 = vsyncpa [#allocation4], 1
    %804 = vsyncpa [#allocation7], 1
    %805 = vsyncpa [#allocation5], 1

</llo_original>
